<compile_context>
chip_gen: v7x
topology: tpu7x:2x2x1
jax: 0.10.0
libtpu: 0.0.40
codegen_flags: <defaults>
</compile_context>

<pallas_src>
import jax
import jax.numpy as jnp
from jax import lax
from jax.experimental import pallas as pl
from jax.experimental.pallas import tpu as pltpu


def _round_up(a, b):
    return (a + b - 1) // b * b


def _make_gate_kernel(chunk):
    def kernel(x_ref, w1_ref, aux_ref, o_ref):
        # x_ref:   (1, C, tp)   channels on sublanes, pixels on lanes
        # w1_ref:  (R, C)       resident VMEM weight
        # aux_ref: (R, 3)       resident VMEM: columns [b1 | w2 | b2]
        # o_ref:   (1, 1, tp)   lane-dense output slab
        R, C = w1_ref.shape
        tp = x_ref.shape[-1]
        n_chunks = tp // chunk

        w1_bf = w1_ref[...].astype(jnp.bfloat16)              # bf16 for MXU push
        aux = aux_ref[...]                                    # (R, 3) f32
        # Hoisted loop-invariant broadcasts (JAX does not CSE broadcast_in_dim).
        b1_bc = jnp.broadcast_to(aux[:, 0:1], (R, chunk))     # (R, chunk)
        w2_bc = jnp.broadcast_to(aux[:, 1:2], (R, chunk))     # (R, chunk)
        b2_bc = jnp.broadcast_to(aux[0:1, 2:3], (1, chunk))   # (1, chunk)

        def body(ci, carry):
            off = pl.multiple_of(ci * chunk, chunk)
            x = x_ref[0, :, pl.ds(off, chunk)].astype(jnp.bfloat16)   # (C, chunk)
            # C -> R projection on the MXU, f32 accumulation.
            h = jnp.dot(w1_bf, x, preferred_element_type=jnp.float32)  # (R, chunk)
            h = jnp.maximum(h + b1_bc, 0.0)                            # bias + ReLU
            # R -> 1: w2-weighted cross-sublane reduction (XLU) + bias.
            y = jnp.sum(w2_bc * h, axis=0, keepdims=True) + b2_bc      # (1, chunk)
            o_ref[0, :, pl.ds(off, chunk)] = jax.nn.sigmoid(y).astype(o_ref.dtype)
            return carry

        lax.fori_loop(0, n_chunks, body, 0, unroll=True)

    return kernel


def spatial_attention_gate(x_nchw, w1, b1, w2, b2, *,
                           tile_pixels=8192, chunk_pixels=512):
    """x_nchw: (N, C, H, W) float32 or bfloat16.
    w1: (R, C) from Conv2d(C, R, 1) weight squeezed, b1: (R,)
    w2: (1, R) from Conv2d(R, 1, 1) weight squeezed, b2: (1,)
    returns (N, 1, H, W) float32."""
    N, C, H, W = x_nchw.shape
    R = w1.shape[0]
    S = H * W

    # Pixel tile: large (amortizes ~0.35us/step), a multiple of the in-kernel
    # compute chunk, clamped near the spatial size. No input padding: ragged
    # edge tiles use Pallas' masked edge-block read/write.
    chunk = max(128, _round_up(chunk_pixels, 128))
    tp = min(_round_up(tile_pixels, chunk), _round_up(S, chunk))
    grid = (N, pl.cdiv(S, tp))

    # NCHW -> (N, C, S): metadata-only reshape, no transpose / extra HBM pass.
    x_flat = x_nchw.reshape(N, C, S)

    w1_m = w1.astype(jnp.float32)                                      # (R, C)
    aux = jnp.concatenate(
        [b1.reshape(R, 1).astype(jnp.float32),
         w2.reshape(R, 1).astype(jnp.float32),
         jnp.broadcast_to(b2.reshape(1, 1).astype(jnp.float32), (R, 1))],
        axis=1)                                                        # (R, 3)

    itemsize = jnp.dtype(x_nchw.dtype).itemsize
    cost = pl.CostEstimate(
        flops=2 * N * S * C * R + 2 * N * S * R,
        transcendentals=N * S,
        bytes_accessed=N * C * S * itemsize + N * S * 4 + (R * C + 3 * R) * 4,
    )

    out = pl.pallas_call(
        _make_gate_kernel(chunk),
        out_shape=jax.ShapeDtypeStruct((N, 1, S), jnp.float32),
        grid_spec=pltpu.PrefetchScalarGridSpec(
            num_scalar_prefetch=0,
            grid=grid,
            in_specs=[
                pl.BlockSpec((1, C, tp), lambda n, s: (n, 0, s)),   # x tile
                pl.BlockSpec((R, C), lambda n, s: (0, 0)),          # W1 (resident)
                pl.BlockSpec((R, 3), lambda n, s: (0, 0)),          # [b1|w2|b2]
            ],
            out_specs=pl.BlockSpec((1, 1, tp), lambda n, s: (n, 0, s)),
        ),
        compiler_params=pltpu.CompilerParams(
            dimension_semantics=("parallel", "parallel")),
        cost_estimate=cost,
    )(x_flat, w1_m, aux)

    # (N, 1, S) -> (N, 1, H, W): metadata-only reshape, no slicing needed.
    return out.reshape(N, 1, H, W)


def _reference(x_nchw, w1, b1, w2, b2):
    # Pure-JAX f32 reference matching PyTorch 1x1-conv semantics.
    h = jnp.einsum("nchw,rc->nrhw", x_nchw, w1) + b1[None, :, None, None]
    h = jnp.maximum(h, 0.0)
    y = jnp.einsum("nrhw,or->nohw", h, w2) + b2[None, :, None, None]
    return jax.nn.sigmoid(y)


if __name__ == "__main__":
    key = jax.random.PRNGKey(0)
    N, C, H, W = 2, 4, 16, 16
    reduction = 16

    k_x, k_w1, k_b1, k_w2, k_b2 = jax.random.split(key, 5)
    x = jax.random.normal(k_x, (N, C, H, W), dtype=jnp.float32)
    # Conv2d(C, R, 1) -> weight (R, C, 1, 1) squeezed to (R, C)
    w1 = jax.random.normal(k_w1, (reduction, C), dtype=jnp.float32) * 0.1
    b1 = jax.random.normal(k_b1, (reduction,), dtype=jnp.float32) * 0.1
    # Conv2d(R, 1, 1) -> weight (1, R, 1, 1) squeezed to (1, R)
    w2 = jax.random.normal(k_w2, (1, reduction), dtype=jnp.float32) * 0.1
    b2 = jax.random.normal(k_b2, (1,), dtype=jnp.float32) * 0.1

    out = spatial_attention_gate(x, w1, b1, w2, b2)
    out = jax.block_until_ready(out)

    ref = _reference(x, w1, b1, w2, b2)
    assert out.shape == (N, 1, H, W), out.shape
    # bf16 MXU push with f32 accumulation ahead of a sigmoid: post-sigmoid
    # error is well below 1e-2 at these magnitudes (tolerance loosened per
    # the review's correctness note).
    assert jnp.allclose(out, ref, atol=1e-2, rtol=1e-2), "mismatch vs reference"

    print("KERNEL_OK")
</pallas_src>

<mosaic_0001>
module attributes {stable_mosaic.version = 11 : i64} {
  func.func @kernel(%arg0: i32, %arg1: i32, %arg2: memref<1x4x512xf32, #tpu.memory_space<vmem>>, %arg3: memref<16x4xf32, #tpu.memory_space<vmem>>, %arg4: memref<16x3xf32, #tpu.memory_space<vmem>>, %arg5: memref<1x1x512xf32, #tpu.memory_space<vmem>>) attributes {dimension_semantics = [#tpu.dimension_semantics<parallel>, #tpu.dimension_semantics<parallel>], iteration_bounds = array<i64: 2, 1>, scalar_prefetch = 0 : i64, scratch_operands = 0 : i64, tpu.core_type = #tpu.core_type<tc>, window_params = [{transform_indices = @transform_0, window_bounds = array<i64: 1, 4, 512>}, {pipeline_mode = #tpu.pipeline_mode<synchronous>, transform_indices = @transform_1, window_bounds = array<i64: 16, 4>}, {pipeline_mode = #tpu.pipeline_mode<synchronous>, transform_indices = @transform_2, window_bounds = array<i64: 16, 3>}, {transform_indices = @transform_3, window_bounds = array<i64: 1, 1, 512>}]} {
    %c0 = arith.constant 0 : index
    %c0_0 = arith.constant 0 : index
    %0 = vector.load %arg3[%c0, %c0_0] : memref<16x4xf32, #tpu.memory_space<vmem>>, vector<16x4xf32>
    %1 = arith.truncf %0 : vector<16x4xf32> to vector<16x4xbf16>
    %c0_1 = arith.constant 0 : index
    %c0_2 = arith.constant 0 : index
    %2 = vector.load %arg4[%c0_1, %c0_2] : memref<16x3xf32, #tpu.memory_space<vmem>>, vector<16x3xf32>
    %3 = vector.extract_strided_slice %2 {offsets = [0, 0], sizes = [16, 1], strides = [1, 1]} : vector<16x3xf32> to vector<16x1xf32>
    %4 = vector.shape_cast %3 : vector<16x1xf32> to vector<16x1xf32>
    %5 = vector.broadcast %4 : vector<16x1xf32> to vector<16x512xf32>
    %6 = vector.extract_strided_slice %2 {offsets = [0, 1], sizes = [16, 1], strides = [1, 1]} : vector<16x3xf32> to vector<16x1xf32>
    %7 = vector.shape_cast %6 : vector<16x1xf32> to vector<16x1xf32>
    %8 = vector.broadcast %7 : vector<16x1xf32> to vector<16x512xf32>
    %9 = vector.extract_strided_slice %2 {offsets = [0, 2], sizes = [1, 1], strides = [1, 1]} : vector<16x3xf32> to vector<1x1xf32>
    %10 = vector.shape_cast %9 : vector<1x1xf32> to vector<1x1xf32>
    %11 = vector.broadcast %10 : vector<1x1xf32> to vector<1x512xf32>
    %c0_i32 = arith.constant 0 : i32
    %c512_i32 = arith.constant 512 : i32
    %12 = arith.muli %c0_i32, %c512_i32 : i32
    %13 = tpu.assume_multiple %12, 512 : i32
    %c0_3 = arith.constant 0 : index
    %c0_4 = arith.constant 0 : index
    %14 = arith.index_cast %13 : i32 to index
    %15 = vector.load %arg2[%c0_3, %c0_4, %14] : memref<1x4x512xf32, #tpu.memory_space<vmem>>, vector<1x4x512xf32>
    %16 = vector.shape_cast %15 : vector<1x4x512xf32> to vector<4x512xf32>
    %17 = arith.truncf %16 : vector<4x512xf32> to vector<4x512xbf16>
    %cst = arith.constant dense<0.000000e+00> : vector<16x512xf32>
    %18 = tpu.matmul %1, %17, %cst {dimension_numbers = #tpu.dot_dimension_numbers<[1], [0], [0], [1], [0, 0, 1, 1], [], []>} : vector<16x4xbf16>, vector<4x512xbf16>, vector<16x512xf32> -> vector<16x512xf32>
    %19 = arith.addf %18, %5 : vector<16x512xf32>
    %cst_5 = arith.constant 0.000000e+00 : f32
    %20 = vector.broadcast %cst_5 : f32 to vector<16x512xf32>
    %21 = arith.maximumf %19, %20 : vector<16x512xf32>
    %22 = arith.mulf %8, %21 : vector<16x512xf32>
    %cst_6 = arith.constant dense<0.000000e+00> : vector<512xf32>
    %23 = vector.multi_reduction <add>, %22, %cst_6 [0] : vector<16x512xf32> to vector<512xf32>
    %24 = vector.shape_cast %23 : vector<512xf32> to vector<1x512xf32>
    %25 = arith.addf %24, %11 : vector<1x512xf32>
    %26 = arith.negf %25 : vector<1x512xf32>
    %27 = math.exp %26 : vector<1x512xf32>
    %cst_7 = arith.constant 1.000000e+00 : f32
    %28 = vector.broadcast %cst_7 : f32 to vector<1x512xf32>
    %29 = arith.addf %28, %27 : vector<1x512xf32>
    %30 = arith.divf %28, %29 : vector<1x512xf32>
    %c0_8 = arith.constant 0 : index
    %c0_9 = arith.constant 0 : index
    %31 = arith.index_cast %13 : i32 to index
    %32 = vector.load %arg5[%c0_8, %c0_9, %31] : memref<1x1x512xf32, #tpu.memory_space<vmem>>, vector<1x1x512xf32>
    %33 = vector.shape_cast %32 : vector<1x1x512xf32> to vector<1x512xf32>
    %34 = vector.shape_cast %30 : vector<1x512xf32> to vector<1x1x512xf32>
    tpu.vector_store %arg5[%c0_8, %c0_9, %31], %34 {strides = array<i32>} : memref<1x1x512xf32, #tpu.memory_space<vmem>>, vector<1x1x512xf32>,
    %c1_i32 = arith.constant 1 : i32
    return
  }
  func.func @transform_0(%arg0: i32, %arg1: i32) -> (i32, i32, i32) {
    %c0_i32 = arith.constant 0 : i32
    %c0_i32_0 = arith.constant 0 : i32
    return %arg0, %c0_i32, %arg1 : i32, i32, i32
  }
  func.func @transform_1(%arg0: i32, %arg1: i32) -> (i32, i32) {
    %c0_i32 = arith.constant 0 : i32
    %c0_i32_0 = arith.constant 0 : i32
    %c0_i32_1 = arith.constant 0 : i32
    return %c0_i32, %c0_i32_0 : i32, i32
  }
  func.func @transform_2(%arg0: i32, %arg1: i32) -> (i32, i32) {
    %c0_i32 = arith.constant 0 : i32
    %c0_i32_0 = arith.constant 0 : i32
    %c0_i32_1 = arith.constant 0 : i32
    return %c0_i32, %c0_i32_0 : i32, i32
  }
  func.func @transform_3(%arg0: i32, %arg1: i32) -> (i32, i32, i32) {
    %c0_i32 = arith.constant 0 : i32
    %c0_i32_0 = arith.constant 0 : i32
    return %arg0, %c0_i32, %arg1 : i32, i32, i32
  }
}

</mosaic_0001>

<llo_original>
// kernel: tpu_custom_call.1
$region0: #{tpu_custom_call.1}
  #allocation0 [shape = 'u32[]', space=smem, size = 0x4, offset = 0x4, fixed_abs, tag = 'smem constant byte address 0x4 - core index']
  #allocation1 [shape = 'u32[144,128]{1,0:T(1,128)}', space=vmem, size = 0x12000, scoped, tag = 'internal scratch']
  %s0 = inlined_call_operand.vmem [shape: f32[2,4,256], index: 0, kind: input, shape index: {}]
  %s1 = inlined_call_operand.vmem [shape: f32[16,4], index: 1, kind: input, shape index: {}]
  %s2 = inlined_call_operand.vmem [shape: f32[16,3], index: 2, kind: input, shape index: {}]
  %s3 = inlined_call_operand.hbm [shape: f32[2,1,256], index: 3, kind: output, shape index: {}]
  %s4 = sld [smem:[#allocation0]]
  $region45: #{tpu_custom_call.1} parent=0
    _
  %s6 = ssub.s32 1, %s4
  %s7 = scalar_select 0, %s6, %s4
  $region1: #{tpu_custom_call.1} parent=0
    #allocation2 [shape = 'u8[4096]{0}', space=vmem, size = 0x1000, scoped, tag = 'output window, operand 0']
    #allocation3 [shape = 's32[2]{0}', space=sflag, size = 0x8, scoped, tag = 'scoped memory for tpu_custom_call.1']
    %8 = vsyncpa [#allocation3], 0
    %s9 = scalar_lea.sflag [#allocation3], 1
    %10 = vsyncpa %s9, 0
    loop: start=0, step=1, limit=4
    $region2: #{tpu_custom_call.1} parent=1 // loop_pre_header
      _
    $region3: #{tpu_custom_call.1} parent=1 // loop_header
      %s12 = sphi 0, %s16
      %p13 = scmp.ge.s32.totalorder %s12, 4
      %s19 = sphi 0, %s31
      %s20 = sphi 0, %s27
      %s21 = sphi 0, %s19
      %s22 = sphi 0, %s20
      %s23 = sphi 0, %s21
      %s24 = sphi 0, %s22
      %s36 = sphi 0, %s38
      %s39 = sphi 0, %s36
      %s40 = sphi 0, %s39
      %s56 = sphi 0, %s40
      %s60 = sphi 0, %s60
      %s62 = sphi 0, %s60
      %s63 = sphi 0, %s62
      %s77 = sphi 0, %s63
      %s81 = sphi 0, %s81
      %s83 = sphi 0, %s81
      %s84 = sphi 0, %s83
      %s98 = sphi 0, %s84
      %s106 = sphi 0, %s108
      %s109 = sphi 0, %s106
      %s110 = sphi 0, %s109
      %s126 = sphi 0, %s110
    $region4: #{tpu_custom_call.1} parent=1 // loop_header_branch
      %15 = sbr.rel (%p13) target = $region8
    $region5: #{tpu_custom_call.1} parent=1 // loop_body
      %s17 = ssub.s32 %s12, 1
      %s18 = ssub.s32 %s12, 2
      %s25 = sadd.s32 1, %s20
      %p26 = scmp.ge.s32.totalorder %s25, 1
      %s27 = scalar_select %p26, 0, %s25
      %s28 = sadd.s32 1, %s19
      %s29 = scalar_select %p26, %s28, %s19
      %p30 = scmp.ge.s32.totalorder %s29, 2
      %s31 = scalar_select %p30, 0, %s29
      %s32 = ssub.s32 %s19, %s31
      %s33 = ssub.s32 %s20, %s27
      %s34 = sor.u32 %s32, %s33
      %p35 = scmp.eq.s32.totalorder %s34, 0
      %s37 = sadd.s32 %s36, 1
      %s38 = scalar_select %p35, %s36, %s37
      %p41 = pneg %p35
      %p42 = scmp.eq.s32.totalorder %s12, 1
      %p43 = por %p41, %p42
      %p44 = scmp.ne.s32.totalorder %s36, %s39
      %p45 = scmp.eq.s32.totalorder %s12, 0
      %p46 = por %p44, %p45
      %p47 = scmp.ne.s32.totalorder %s36, %s39
      %p48 = scmp.eq.s32.totalorder %s17, 1
      %p49 = por %p47, %p48
      %p50 = scmp.ne.s32.totalorder %s39, %s40
      %p51 = scmp.eq.s32.totalorder %s17, 0
      %p52 = por %p50, %p51
      %p53 = scmp.ne.s32.totalorder %s39, %s40
      %p54 = scmp.eq.s32.totalorder %s18, 1
      %p55 = por %p53, %p54
      %p57 = scmp.ne.s32.totalorder %s40, %s56
      %p58 = scmp.eq.s32.totalorder %s18, 0
      %p59 = por %p57, %p58
      %s61 = sadd.s32 %s60, 1
      %p64 = scmp.eq.s32.totalorder %s12, 1
      %p65 = scmp.ne.s32.totalorder %s60, %s62
      %p66 = scmp.eq.s32.totalorder %s12, 0
      %p67 = por %p65, %p66
      %p68 = scmp.ne.s32.totalorder %s60, %s62
      %p69 = scmp.eq.s32.totalorder %s17, 1
      %p70 = por %p68, %p69
      %p71 = scmp.ne.s32.totalorder %s62, %s63
      %p72 = scmp.eq.s32.totalorder %s17, 0
      %p73 = por %p71, %p72
      %p74 = scmp.ne.s32.totalorder %s62, %s63
      %p75 = scmp.eq.s32.totalorder %s18, 1
      %p76 = por %p74, %p75
      %p78 = scmp.ne.s32.totalorder %s63, %s77
      %p79 = scmp.eq.s32.totalorder %s18, 0
      %p80 = por %p78, %p79
      %s82 = sadd.s32 %s81, 1
      %p85 = scmp.eq.s32.totalorder %s12, 1
      %p86 = scmp.ne.s32.totalorder %s81, %s83
      %p87 = scmp.eq.s32.totalorder %s12, 0
      %p88 = por %p86, %p87
      %p89 = scmp.ne.s32.totalorder %s81, %s83
      %p90 = scmp.eq.s32.totalorder %s17, 1
      %p91 = por %p89, %p90
      %p92 = scmp.ne.s32.totalorder %s83, %s84
      %p93 = scmp.eq.s32.totalorder %s17, 0
      %p94 = por %p92, %p93
      %p95 = scmp.ne.s32.totalorder %s83, %s84
      %p96 = scmp.eq.s32.totalorder %s18, 1
      %p97 = por %p95, %p96
      %p99 = scmp.ne.s32.totalorder %s84, %s98
      %p100 = scmp.eq.s32.totalorder %s18, 0
      %p101 = por %p99, %p100
      %s102 = ssub.s32 %s19, %s31
      %s103 = ssub.s32 %s20, %s27
      %s104 = sor.u32 %s102, %s103
      %p105 = scmp.eq.s32.totalorder %s104, 0
      %s107 = sadd.s32 %s106, 1
      %s108 = scalar_select %p105, %s106, %s107
      %p111 = pneg %p105
      %p112 = scmp.eq.s32.totalorder %s12, 1
      %p113 = por %p111, %p112
      %p114 = scmp.ne.s32.totalorder %s106, %s109
      %p115 = scmp.eq.s32.totalorder %s12, 0
      %p116 = por %p114, %p115
      %p117 = scmp.ne.s32.totalorder %s106, %s109
      %p118 = scmp.eq.s32.totalorder %s17, 1
      %p119 = por %p117, %p118
      %p120 = scmp.ne.s32.totalorder %s109, %s110
      %p121 = scmp.eq.s32.totalorder %s17, 0
      %p122 = por %p120, %p121
      %p123 = scmp.ne.s32.totalorder %s109, %s110
      %p124 = scmp.eq.s32.totalorder %s18, 1
      %p125 = por %p123, %p124
      %p127 = scmp.ne.s32.totalorder %s110, %s126
      %p128 = scmp.eq.s32.totalorder %s18, 0
      %p129 = por %p127, %p128
      %p130 = scmp.le.s32.totalorder 1, %s12
      %p131 = scmp.lt.s32.totalorder %s12, 3
      %p132 = pnand %p130, %p131
      %p133 = pneg %p132
      // Predicated region
      $region9: #{tpu_custom_call.1} parent=5 // pred_check
        _
      $region10: #{tpu_custom_call.1} parent=5 // pred_check_branch
        %135 = sbr.rel (%p132) target = $region12
      $region11: #{tpu_custom_call.1} parent=5 // pred_region
        %s136 = ssub.s32 %s12, 1
        // Predicated region
        $region13: #{tpu_custom_call.1} parent=11 // pred_check
          %p137 = pneg %p73
        $region14: #{tpu_custom_call.1} parent=11 // pred_check_branch
          %139 = sbr.rel (%p137) target = $region16
        $region15: #{tpu_custom_call.1} parent=11 // pred_region
          _
        $region16: #{tpu_custom_call.1} parent=11 // pred_fallthru
          _
        // Predicated region
        $region17: #{tpu_custom_call.1} parent=11 // pred_check
          %p140 = pneg %p94
        $region18: #{tpu_custom_call.1} parent=11 // pred_check_branch
          %142 = sbr.rel (%p140) target = $region20
        $region19: #{tpu_custom_call.1} parent=11 // pred_region
          _
        $region20: #{tpu_custom_call.1} parent=11 // pred_fallthru
          _
      $region12: #{tpu_custom_call.1} parent=5 // pred_fallthru
        _
      %p143 = scmp.lt.s32.totalorder %s12, 2
      // Predicated region
      $region21: #{tpu_custom_call.1} parent=5 // pred_check
        %p144 = pneg %p143
      $region22: #{tpu_custom_call.1} parent=5 // pred_check_branch
        %146 = sbr.rel (%p144) target = $region24
      $region23: #{tpu_custom_call.1} parent=5 // pred_region
        // Predicated region
        $region25: #{tpu_custom_call.1} parent=23 // pred_check
          %p147 = pneg %p46
        $region26: #{tpu_custom_call.1} parent=23 // pred_check_branch
          %149 = sbr.rel (%p147) target = $region28
        $region27: #{tpu_custom_call.1} parent=23 // pred_region
          %s150 = smul.u32 4, %s20
          %s151 = ssub.s32 2, %s150
          %s152 = smul.u32 64, %s151
          %p153 = scmp.lt.s32.totalorder %s19, 1
          %s154 = scalar_select %p153, %s19, 1
          %p155 = scmp.lt.s32.totalorder %s150, 1
          %s156 = scalar_select %p155, %s150, 1
          %s157 = smul.addr %s154, 2
          %s158 = sadd.s32 %s156, %s157
          %s159 = smul.addr %s158, 4
          %s160 = scalar_lea.vmem %s0, %s159
          %s161 = smul.u32 4, %s20
          %s162 = ssub.s32 2, %s161
          %s163 = smul.u32 64, %s162
        $region28: #{tpu_custom_call.1} parent=23 // pred_fallthru
          _
      $region24: #{tpu_custom_call.1} parent=5 // pred_fallthru
        _
      %p164 = scmp.le.s32.totalorder 1, %s12
      %p165 = scmp.lt.s32.totalorder %s12, 3
      %p166 = pnand %p164, %p165
      %p167 = pneg %p166
      // Predicated region
      $region29: #{tpu_custom_call.1} parent=5 // pred_check
        _
      $region30: #{tpu_custom_call.1} parent=5 // pred_check_branch
        %169 = sbr.rel (%p166) target = $region32
      $region31: #{tpu_custom_call.1} parent=5 // pred_region
        %s170 = ssub.s32 %s12, 1
        %s171 = smul.u32 4, %s22
        %s172 = ssub.s32 2, %s171
        %s173 = smul.u32 64, %s172
        %p174 = scmp.lt.s32.totalorder %s21, 1
        %s175 = scalar_select %p174, %s21, 1
        %p176 = scmp.lt.s32.totalorder %s171, 1
        %s177 = scalar_select %p176, %s171, 1
        %s178 = smul.addr %s175, 2
        %s179 = sadd.s32 %s177, %s178
        %s180 = smul.addr %s179, 4
        %s181 = scalar_lea.vmem %s0, %s180
        %p182 = pneg %p52
        %p183 = pneg %p49
        %p184 = pneg %p73
        %p185 = pneg %p70
        %p186 = pneg %p94
        %p187 = pneg %p91
        %p188 = pneg %p122
        %p189 = pneg %p119
        %s190 = sand.u32 %s109, 1
        %s191 = scalar_lea.sflag [#allocation3], %s190
        %s192 = sand.u32 %s109, 1
        %s193 = smul.addr %s192, 4
        %s194 = scalar_lea.vmem [#allocation2], %s193
        %s195 = smul.u32 4, %s22
        %s196 = ssub.s32 2, %s195
        %s197 = smul.u32 64, %s196
        %p198 = scmp.lt.s32.totalorder %s21, 1
        %s199 = scalar_select %p198, %s21, 1
        %p200 = scmp.lt.s32.totalorder %s195, 1
        %s201 = scalar_select %p200, %s195, 1
        %s202 = smul.addr %s199, 2
        %s203 = sadd.s32 %s201, %s202
        %s204 = smul.addr %s203, 4
        %s205 = scalar_lea.vmem %s0, %s204
        %s206 = smul.u32 4, %s22
        %s207 = ssub.s32 2, %s206
        %s208 = smul.u32 64, %s207
        %s209 = smul.u32 4, %s22
        %s210 = ssub.s32 2, %s209
        %s211 = smul.u32 16, %s210
        %v213 = vld [vmem:[%s1] sm:$0xff]
        %v214 = vld [vmem:[%s1 + $0x8] sm:$0xff]
        %v215 = vpack.c.bf16 %v214, %v213
        %v216 = vld [vmem:[%s2] sm:$0xff]
        %v217 = vld [vmem:[%s2 + $0x8] sm:$0xff]
        %219 = vset.pattern.permute.xlu0 0
        %220 = vperm.xlu0 %219, %v216
        %v221 = vpop.permute.xlu0 %220
        %224 = vset.pattern.permute.xlu0 0
        %225 = vperm.xlu0 %224, %v217
        %v226 = vpop.permute.xlu0 %225
        %228 = vset.pattern.permute.xlu0 1
        %229 = vperm.xlu0 %228, %v216
        %v230 = vpop.permute.xlu0 %229
        %232 = vset.pattern.permute.xlu0 1
        %233 = vperm.xlu0 %232, %v217
        %v234 = vpop.permute.xlu0 %233
        %236 = vset.pattern.permute.xlu0 2
        %237 = vperm.xlu0 %236, %v216
        %v238 = vpop.permute.xlu0 %237
        %v240 = vld [vmem:[%s205] sm:$0xff]
        %v241 = vld [vmem:[%s205 + $0x8] sm:$0xff]
        %v244 = vcombine.high %v240, %v240
        %v245 = vcombine.high %v241, %v241
        %v248 = vpack.c.bf16 %v240, %v240
        %v249 = vpack.c.bf16 %v244, %v244
        %v250 = vpack.c.bf16 %v241, %v241
        %v251 = vpack.c.bf16 %v245, %v245
        %vm252 = vcmask 31744
        %v254 = vsel %vm252, %v215, 0
        %vm256 = vcmask 1041408
        %v258 = vsel %vm256, %v248, 0
        %v261 = vsel %vm256, %v249, 0
        %v264 = vsel %vm256, %v250, 0
        %v267 = vsel %vm256, %v251, 0
        %269 = vmatprep.subr.bf16.mxu0 %v261
        %270 = vmatpush1.bf16.msra.mxu0 %v258
        %271 = vmatprep.subr.bf16.mxu0 0
        %272 = vmatpush1.bf16.msra.mxu0 0
        %273 = vmatprep.subr.bf16.mxu0 0
        %274 = vmatpush1.bf16.msra.mxu0 0
        %275 = vmatprep.subr.bf16.mxu0 0
        %276 = vmatpush1.bf16.msra.mxu0 0
        %277 = vmatprep.subr.bf16.mxu0 0
        %278 = vmatpush1.bf16.msra.mxu0 0
        %279 = vmatprep.subr.bf16.mxu0 0
        %280 = vmatpush1.bf16.msra.mxu0 0
        %281 = vmatprep.subr.bf16.mxu0 0
        %282 = vmatpush1.bf16.msra.mxu0 0
        %283 = vmatprep.subr.bf16.mxu0 0
        %284 = vmatpush1.bf16.msra.mxu0 0
        %285 = vmatprep.subr.bf16.mxu0 0
        %286 = vmatpush1.bf16.msra.mxu0 0
        %287 = vmatprep.subr.bf16.mxu0 0
        %288 = vmatpush1.bf16.msra.mxu0 0
        %289 = vmatprep.subr.bf16.mxu0 0
        %290 = vmatpush1.bf16.msra.mxu0 0
        %291 = vmatprep.subr.bf16.mxu0 0
        %292 = vmatpush1.bf16.msra.mxu0 0
        %293 = vmatprep.subr.bf16.mxu0 0
        %294 = vmatpush1.bf16.msra.mxu0 0
        %295 = vmatprep.subr.bf16.mxu0 0
        %296 = vmatpush1.bf16.msra.mxu0 0
        %297 = vmatprep.subr.bf16.mxu0 0
        %298 = vmatpush1.bf16.msra.mxu0 0
        %299 = vmatprep.subr.bf16.mxu0 0
        %300 = vmatpush1.bf16.msra.mxu0 0
        %301 = vmatprep.mubr.bf16.mxu0 0
        %302 = vmatmul.mubr.bf16.gmra.mrb[0].mxu0 %v254
        %v303 = vpop.f32.mrb[0].mxu0
        %v304 = vadd.f32 %v221, %v303
        %v305 = vpop.f32.mrb[0].mxu0
        %v306 = vadd.f32 %v221, %v305
        %v307 = vpop.f32.mrb[0].mxu0
        %v308 = vadd.f32 %v226, %v307
        %v309 = vpop.f32.mrb[0].mxu0
        %v310 = vadd.f32 %v226, %v309
        %311 = vdwg.mxu0
        %312 = vmatprep.subr.bf16.mxu0 %v267
        %313 = vmatpush1.bf16.msra.mxu0 %v264
        %314 = vmatprep.subr.bf16.mxu0 0
        %315 = vmatpush1.bf16.msra.mxu0 0
        %316 = vmatprep.subr.bf16.mxu0 0
        %317 = vmatpush1.bf16.msra.mxu0 0
        %318 = vmatprep.subr.bf16.mxu0 0
        %319 = vmatpush1.bf16.msra.mxu0 0
        %320 = vmatprep.subr.bf16.mxu0 0
        %321 = vmatpush1.bf16.msra.mxu0 0
        %322 = vmatprep.subr.bf16.mxu0 0
        %323 = vmatpush1.bf16.msra.mxu0 0
        %324 = vmatprep.subr.bf16.mxu0 0
        %325 = vmatpush1.bf16.msra.mxu0 0
        %326 = vmatprep.subr.bf16.mxu0 0
        %327 = vmatpush1.bf16.msra.mxu0 0
        %328 = vmatprep.subr.bf16.mxu0 0
        %329 = vmatpush1.bf16.msra.mxu0 0
        %330 = vmatprep.subr.bf16.mxu0 0
        %331 = vmatpush1.bf16.msra.mxu0 0
        %332 = vmatprep.subr.bf16.mxu0 0
        %333 = vmatpush1.bf16.msra.mxu0 0
        %334 = vmatprep.subr.bf16.mxu0 0
        %335 = vmatpush1.bf16.msra.mxu0 0
        %336 = vmatprep.subr.bf16.mxu0 0
        %337 = vmatpush1.bf16.msra.mxu0 0
        %338 = vmatprep.subr.bf16.mxu0 0
        %339 = vmatpush1.bf16.msra.mxu0 0
        %340 = vmatprep.subr.bf16.mxu0 0
        %341 = vmatpush1.bf16.msra.mxu0 0
        %342 = vmatprep.subr.bf16.mxu0 0
        %343 = vmatpush1.bf16.msra.mxu0 0
        %344 = vmatprep.mubr.bf16.mxu0 0
        %345 = vmatmul.mubr.bf16.gmra.mrb[0].mxu0 %v254
        %v346 = vpop.f32.mrb[0].mxu0
        %v347 = vadd.f32 %v221, %v346
        %v348 = vpop.f32.mrb[0].mxu0
        %v349 = vadd.f32 %v221, %v348
        %v350 = vpop.f32.mrb[0].mxu0
        %v351 = vadd.f32 %v226, %v350
        %v352 = vpop.f32.mrb[0].mxu0
        %v353 = vadd.f32 %v226, %v352
        %354 = vdwg.mxu0
        %v355 = vmax.f32 %v304, 0.0
        %v356 = vmax.f32 %v306, 0.0
        %v357 = vmax.f32 %v347, 0.0
        %v358 = vmax.f32 %v349, 0.0
        %v359 = vmax.f32 %v308, 0.0
        %v360 = vmax.f32 %v310, 0.0
        %v361 = vmax.f32 %v351, 0.0
        %v362 = vmax.f32 %v353, 0.0
        %v363 = vmul.f32 %v230, %v355
        %v364 = vmul.f32 %v230, %v356
        %v365 = vmul.f32 %v230, %v357
        %v366 = vmul.f32 %v230, %v358
        %v367 = vmul.f32 %v234, %v359
        %v368 = vmul.f32 %v234, %v360
        %v369 = vmul.f32 %v234, %v361
        %v370 = vmul.f32 %v234, %v362
        %v371 = vadd.f32 %v363, %v367
        %v372 = vrot.slane %v371, 4
        %v373 = vadd.f32 %v371, %v372
        %v374 = vrot.slane %v373, 2
        %v375 = vadd.f32 %v373, %v374
        %v376 = vrot.slane %v375, 1
        %v377 = vadd.f32 %v375, %v376
        %v378 = vadd.f32 %v364, %v368
        %v379 = vrot.slane %v378, 4
        %v380 = vadd.f32 %v378, %v379
        %v381 = vrot.slane %v380, 2
        %v382 = vadd.f32 %v380, %v381
        %v383 = vrot.slane %v382, 1
        %v384 = vadd.f32 %v382, %v383
        %v385 = vadd.f32 %v365, %v369
        %v386 = vrot.slane %v385, 4
        %v387 = vadd.f32 %v385, %v386
        %v388 = vrot.slane %v387, 2
        %v389 = vadd.f32 %v387, %v388
        %v390 = vrot.slane %v389, 1
        %v391 = vadd.f32 %v389, %v390
        %v392 = vadd.f32 %v366, %v370
        %v393 = vrot.slane %v392, 4
        %v394 = vadd.f32 %v392, %v393
        %v395 = vrot.slane %v394, 2
        %v396 = vadd.f32 %v394, %v395
        %v397 = vrot.slane %v396, 1
        %v398 = vadd.f32 %v396, %v397
        %v399 = vadd.f32 %v377, %v238
        %v400 = vadd.f32 %v384, %v238
        %v401 = vadd.f32 %v391, %v238
        %v402 = vadd.f32 %v398, %v238
        %v403 = vxor.u32 %v399, 2147483648
        %v404 = vxor.u32 %v400, 2147483648
        %v405 = vxor.u32 %v401, 2147483648
        %v406 = vxor.u32 %v402, 2147483648
        %v407 = vmul.f32 %v403, 1.442695
        %v408 = vpow.pop %v407
        %v409 = vmul.f32 %v404, 1.442695
        %v410 = vpow.pop %v409
        %v411 = vmul.f32 %v405, 1.442695
        %v412 = vpow.pop %v411
        %v413 = vmul.f32 %v406, 1.442695
        %v414 = vpow.pop %v413
        %v415 = vadd.f32 %v408, 1.0
        %v416 = vadd.f32 %v410, 1.0
        %v417 = vadd.f32 %v412, 1.0
        %v418 = vadd.f32 %v414, 1.0
        %v419 = vrcp.pop %v415
        %v420 = vmul.f32 1.0, %v419
        %v421 = vrcp.pop %v416
        %v422 = vmul.f32 1.0, %v421
        %v423 = vrcp.pop %v417
        %v424 = vmul.f32 1.0, %v423
        %v425 = vrcp.pop %v418
        %v426 = vmul.f32 1.0, %v425
        %v431 = vcombine.low %v420, %v422
        %v432 = vcombine.low %v424, %v426
        %v434 = vunpack.c.l.s4 1966171168
        %v435 = vunpack.c.0.s8 %v434
        %v436 = vlaneseq
        %v437 = vshrl.u32 %v436, 7
        %v438 = vsub.s32 %v435, %v437
        %v439 = vrot.slane %v431, %v438
        %v441 = vunpack.c.l.s4 1966171168
        %v442 = vunpack.c.0.s8 %v441
        %v443 = vlaneseq
        %v444 = vshrl.u32 %v443, 7
        %v445 = vsub.s32 %v442, %v444
        %v446 = vrot.slane %v432, %v445
        %v447 = vcombine.low %v439, %v446
        %v449 = vunpack.c.l.s4 1966171168
        %v450 = vunpack.c.0.s8 %v449
        %v451 = vlaneseq
        %v452 = vshrl.u32 %v451, 7
        %v453 = vsub.s32 %v450, %v452
        %v454 = vrot.slane %v447, %v453
        %v456 = vlaneseq
        %vm457 = vcmp.ge.s32.totalorder %v456, 0
        %vm458 = vcmp.lt.s32.totalorder %v456, 512
        %vm459 = vmand %vm457, %vm458
        %460 = vst.msk [vmem:[%s194] sm:$0xf] %vm459, %v454
        %s461 = sand.u32 %s109, 1
        %s462 = scalar_lea.sflag [#allocation3], %s461
        %s463 = sand.u32 %s109, 1
        %s464 = smul.addr %s463, 4
        %s465 = scalar_lea.vmem [#allocation2], %s464
        // Predicated region
        $region33: #{tpu_custom_call.1} parent=31 // pred_check
          %p466 = pneg %p119
        $region34: #{tpu_custom_call.1} parent=31 // pred_check_branch
          %468 = sbr.rel (%p466) target = $region36
        $region35: #{tpu_custom_call.1} parent=31 // pred_region
          %s469 = smul.u32 4, %s22
          %s470 = ssub.s32 2, %s469
          %s471 = smul.u32 16, %s470
          %s473 = ssub.s32 64, %s471
          %474 = vsyncadd %s462, %s473
          %p475 = scmp.ne.s32.totalorder 0, %s471
          %s476 = smul.addr %s21, 2
          %s477 = sadd.s32 %s469, %s476
          %s478 = smul.addr %s477, 16
          %s479 = scalar_lea.hbm %s3, %s478
          %s480 = sshll.u32 %s470, 4
          %s481 = sshll.u32 %s465, 4
          %s482 = int_to_ptr.vmem [resolvable:$true] %s481
          %484 = dma.vmem_to_hbm [thread:$0]  (%p475), %s482, %s480, %s479, %s462
        $region36: #{tpu_custom_call.1} parent=31 // pred_fallthru
          _
      $region32: #{tpu_custom_call.1} parent=5 // pred_fallthru
        _
      %p485 = scmp.le.s32.totalorder 2, %s12
      // Predicated region
      $region37: #{tpu_custom_call.1} parent=5 // pred_check
        %p486 = pneg %p485
      $region38: #{tpu_custom_call.1} parent=5 // pred_check_branch
        %488 = sbr.rel (%p486) target = $region40
      $region39: #{tpu_custom_call.1} parent=5 // pred_region
        %s489 = ssub.s32 %s12, 2
        // Predicated region
        $region41: #{tpu_custom_call.1} parent=39 // pred_check
          %p490 = pneg %p125
        $region42: #{tpu_custom_call.1} parent=39 // pred_check_branch
          %492 = sbr.rel (%p490) target = $region44
        $region43: #{tpu_custom_call.1} parent=39 // pred_region
          %s493 = sand.u32 %s110, 1
          %s494 = scalar_lea.sflag [#allocation3], %s493
          %s495 = sand.u32 %s110, 1
          %s496 = smul.addr %s495, 4
          %s497 = scalar_lea.vmem [#allocation2], %s496
          %498 = dma.done %s494, 64
        $region44: #{tpu_custom_call.1} parent=39 // pred_fallthru
          _
      $region40: #{tpu_custom_call.1} parent=5 // pred_fallthru
        _
    $region6: #{tpu_custom_call.1} parent=1 // loop_footer
      %s16 = sadd.s32 1, %s12
    $region7: #{tpu_custom_call.1} parent=1 // loop_footer_branch
      %11 = sbr.rel target = $region3
    $region8: #{tpu_custom_call.1} parent=1 // loop_exit
      _
    %499 = vsyncpa [#allocation3], 1
    %s500 = scalar_lea.sflag [#allocation3], 1
    %501 = vsyncpa %s500, 1

</llo_original>
